<compile_context>
chip_gen: v6e
topology: v6e:2x2x1
jax: 0.10.0
libtpu: 0.0.40
codegen_flags: <defaults>
</compile_context>

<pallas_src>
import jax
import jax.numpy as jnp
from jax.experimental import pallas as pl
from jax.experimental.pallas import tpu as pltpu


def _pos_embed_kernel(x_ref, emb_ref, o_ref):
    # x_ref: (TH, TW) or (B, TH, TW); emb_ref: (TH, TW) -> broadcasts over B.
    o_ref[...] = (x_ref[...] + emb_ref[...]).astype(o_ref.dtype)


def _vmem_capacity_bytes():
    """Physical VMEM capacity (bytes) and whether we actually know it."""
    try:
        info = pltpu.get_tpu_info()
        cap = int(getattr(info, "vmem_capacity_bytes", 0) or 0)
        if cap > 0:
            return cap, True
    except Exception:
        pass
    return 64 << 20, False  # conservative default (v7x-sized)


def _divisors_mult_desc(n, m):
    """Divisors of n that are multiples of m, descending."""
    return [d for d in range(m, n + 1, m) if n % d == 0][::-1]


def _pick_tiles(H, WD, itemsize, max_block_bytes, sub):
    """Pick (TH, TW): TH | H (multiple of sub, then 8, else full H),
    TW | WD (multiple of 128, else full WD), TH*TW*itemsize <= budget."""
    max_elems = max(max_block_bytes // itemsize, sub * 128)

    def best_rows(tw):
        if H * tw <= max_elems:
            return H
        for mult in (sub, 8):
            cands = [th for th in range(mult, H, mult)
                     if H % th == 0 and th * tw <= max_elems]
            if cands:
                return max(cands)
        return None

    lane_cands = [WD]
    if WD % 128 == 0:
        lane_cands += [tw for tw in _divisors_mult_desc(WD, 128) if tw != WD]

    for tw in lane_cands:
        th = best_rows(tw)
        if th is not None:
            return th, tw
    # Fallback: full rows, narrowest legal lane tile (always layout-legal).
    return H, lane_cands[-1]


def position_embedding(x: jax.Array, embeddings: jax.Array) -> jax.Array:
    """Add learned position embeddings.

    Args:
        x:          (B, H, W, D)
        embeddings: (H, W, D)
    Returns:
        (B, H, W, D), same dtype as x.
    """
    B, H, W, D = x.shape
    assert embeddings.shape == (H, W, D)
    WD = W * D

    # Pre-cast params once: halves embedding HBM traffic for mixed dtypes.
    if embeddings.dtype != x.dtype:
        embeddings = embeddings.astype(x.dtype)

    # Free (contiguous) lane-dense views.
    x2 = x.reshape(B, H, WD)
    e2 = embeddings.reshape(H, WD)

    itemsize = jnp.dtype(x.dtype).itemsize
    sub = max(8, 32 // itemsize)  # dtype-native sublane multiple: 8/16/32

    vmem_cap, cap_known = _vmem_capacity_bytes()
    # VMEM we allow the kernel to use: ~0.6x on 64 MiB parts, ~0.75x on 128 MiB.
    clamp_cap = int(0.6 * vmem_cap) if vmem_cap <= (64 << 20) else int(0.75 * vmem_cap)
    # Per-block budget: 3 arrays (x, emb, out) x 2 buffers each.
    max_block_bytes = max(clamp_cap // 6, 1 << 20)
    likely_two_cores = cap_known and vmem_cap <= (64 << 20)  # v7x proxy

    x_total_bytes = B * H * WD * itemsize

    if x_total_bytes <= max_block_bytes:
        # --- Small-problem path: batch stays inside the block, 1-2 grid steps.
        TH, n_h = H, 1
        if likely_two_cores and H % 2 == 0 and (H // 2) % sub == 0:
            TH, n_h = H // 2, 2  # give both v7x TensorCores an iteration
        need = 2 * (2 * B * TH * WD + TH * WD) * itemsize
        grid = (n_h,)
        in_specs = [
            pl.BlockSpec((B, TH, WD), lambda h: (0, h, 0)),
            pl.BlockSpec((TH, WD), lambda h: (h, 0)),
        ]
        out_specs = pl.BlockSpec((B, TH, WD), lambda h: (0, h, 0))
        semantics = ("parallel",)
    else:
        # --- General path: tile rows (and lanes if needed), batch squeezed.
        TH, TW = _pick_tiles(H, WD, itemsize, max_block_bytes, sub)
        n_h = H // TH
        n_w = WD // TW
        need = 2 * 3 * TH * TW * itemsize
        grid = (n_h, n_w, B)  # B innermost: emb block constant across batch
        in_specs = [
            pl.BlockSpec((None, TH, TW), lambda h, w, b: (b, h, w)),
            pl.BlockSpec((TH, TW), lambda h, w, b: (h, w)),
        ]
        out_specs = pl.BlockSpec((None, TH, TW), lambda h, w, b: (b, h, w))
        semantics = ("parallel", "parallel", "parallel")

    # Derive the scoped-VMEM limit from the chosen blocks, never exceeding
    # physical VMEM and never starving double-buffering.
    vmem_limit = min(clamp_cap, max(2 * need + (1 << 20), 16 << 20))
    vmem_limit = max(vmem_limit, need + (1 << 20))
    vmem_limit = int(min(vmem_limit, vmem_cap))

    out2 = pl.pallas_call(
        _pos_embed_kernel,
        out_shape=jax.ShapeDtypeStruct((B, H, WD), x.dtype),
        grid_spec=pltpu.PrefetchScalarGridSpec(
            num_scalar_prefetch=0,
            grid=grid,
            in_specs=in_specs,
            out_specs=out_specs,
        ),
        compiler_params=pltpu.CompilerParams(
            dimension_semantics=semantics,
            vmem_limit_bytes=vmem_limit,
        ),
        # TODO(synk): enable input_output_aliases={0: 0} when callers can donate x.
    )(x2, e2)

    return out2.reshape(B, H, W, D)


if __name__ == "__main__":
    # Module config: token_dimension=D, height=H, width=W, init_scale=0.1
    B, H, W, D = 2, 16, 16, 32
    init_scale = 0.1

    key = jax.random.PRNGKey(0)
    k_x, k_emb = jax.random.split(key)

    x = jax.random.normal(k_x, (B, H, W, D), dtype=jnp.float32)
    # Deterministic synthetic parameter (mirrors init_scale * randn(H, W, D))
    embeddings = init_scale * jax.random.normal(k_emb, (H, W, D), dtype=jnp.float32)

    out = position_embedding(x, embeddings)
    jax.block_until_ready(out)

    # Correctness check against plain-JAX reference of the PyTorch forward.
    ref = x + embeddings[None, :, :, :]
    assert out.shape == (B, H, W, D)
    assert out.dtype == x.dtype
    assert jnp.allclose(out, ref, atol=1e-6, rtol=1e-6)

    print("KERNEL_OK")
</pallas_src>

<mosaic_0001>
module attributes {stable_mosaic.version = 11 : i64} {
  func.func @_pos_embed_kernel(%arg0: i32, %arg1: memref<2x16x512xf32, #tpu.memory_space<vmem>>, %arg2: memref<16x512xf32, #tpu.memory_space<vmem>>, %arg3: memref<2x16x512xf32, #tpu.memory_space<vmem>>) attributes {dimension_semantics = [#tpu.dimension_semantics<parallel>], iteration_bounds = array<i64: 1>, scalar_prefetch = 0 : i64, scratch_operands = 0 : i64, tpu.core_type = #tpu.core_type<tc>, window_params = [{transform_indices = @transform_0, window_bounds = array<i64: 2, 16, 512>}, {transform_indices = @transform_1, window_bounds = array<i64: 16, 512>}, {transform_indices = @transform_2, window_bounds = array<i64: 2, 16, 512>}]} {
    %c0 = arith.constant 0 : index
    %c0_0 = arith.constant 0 : index
    %c0_1 = arith.constant 0 : index
    %0 = vector.load %arg1[%c0, %c0_0, %c0_1] : memref<2x16x512xf32, #tpu.memory_space<vmem>>, vector<2x16x512xf32>
    %c0_2 = arith.constant 0 : index
    %c0_3 = arith.constant 0 : index
    %1 = vector.load %arg2[%c0_2, %c0_3] : memref<16x512xf32, #tpu.memory_space<vmem>>, vector<16x512xf32>
    %2 = vector.shape_cast %1 : vector<16x512xf32> to vector<1x16x512xf32>
    %3 = vector.broadcast %2 : vector<1x16x512xf32> to vector<2x16x512xf32>
    %4 = arith.addf %0, %3 : vector<2x16x512xf32>
    %c0_4 = arith.constant 0 : index
    %c0_5 = arith.constant 0 : index
    %c0_6 = arith.constant 0 : index
    %5 = vector.load %arg3[%c0_4, %c0_5, %c0_6] : memref<2x16x512xf32, #tpu.memory_space<vmem>>, vector<2x16x512xf32>
    tpu.vector_store %arg3[%c0_4, %c0_5, %c0_6], %4 {strides = array<i32>} : memref<2x16x512xf32, #tpu.memory_space<vmem>>, vector<2x16x512xf32>,
    return
  }
  func.func @transform_0(%arg0: i32) -> (i32, i32, i32) {
    %c0_i32 = arith.constant 0 : i32
    %c0_i32_0 = arith.constant 0 : i32
    %c0_i32_1 = arith.constant 0 : i32
    return %c0_i32, %arg0, %c0_i32_0 : i32, i32, i32
  }
  func.func @transform_1(%arg0: i32) -> (i32, i32) {
    %c0_i32 = arith.constant 0 : i32
    %c0_i32_0 = arith.constant 0 : i32
    return %arg0, %c0_i32 : i32, i32
  }
  func.func @transform_2(%arg0: i32) -> (i32, i32, i32) {
    %c0_i32 = arith.constant 0 : i32
    %c0_i32_0 = arith.constant 0 : i32
    %c0_i32_1 = arith.constant 0 : i32
    return %c0_i32, %arg0, %c0_i32_0 : i32, i32, i32
  }
}

</mosaic_0001>

<llo_original>
// kernel: tpu_custom_call.1
$region0: #{tpu_custom_call.1}
  #allocation0 [shape = 'u32[]', space=smem, size = 0x4, offset = 0x4, fixed_abs, tag = 'smem constant byte address 0x4 - core index']
  #allocation1 [shape = 'u32[144,128]{1,0:T(1,128)}', space=vmem, size = 0x12000, scoped, tag = 'internal scratch']
  %s0 = inlined_call_operand.hbm [shape: f32[2,16,512], index: 0, kind: input, shape index: {}]
  %s1 = inlined_call_operand.hbm [shape: f32[16,512], index: 1, kind: input, shape index: {}]
  %s2 = inlined_call_operand.hbm [shape: f32[2,16,512], index: 2, kind: output, shape index: {}]
  %s3 = sld [smem:[#allocation0]]
  $region26: #{tpu_custom_call.1} parent=0
    _
  %s5 = ssub.s32 1, %s3
  %s6 = scalar_select 0, %s5, %s3
  $region1: #{tpu_custom_call.1} parent=0
    #allocation2 [shape = 'u8[65536]{0}', space=vmem, size = 0x10000, scoped, tag = 'input window, operand 0, single buffered']
    #allocation3 [shape = 's32[1]{0}', space=sflag, size = 0x4, scoped, tag = 'scoped memory for tpu_custom_call.1']
    #allocation4 [shape = 's32[1]{0}', space=sflag, size = 0x4, scoped, tag = 'scoped memory for tpu_custom_call.1']
    #allocation5 [shape = 'u8[32768]{0}', space=vmem, size = 0x8000, scoped, tag = 'input window, operand 1, single buffered']
    #allocation6 [shape = 's32[1]{0}', space=sflag, size = 0x4, scoped, tag = 'scoped memory for tpu_custom_call.1']
    #allocation7 [shape = 'u8[65536]{0}', space=vmem, size = 0x10000, scoped, tag = 'output window, operand 0, single buffered']
    %7 = vsyncpa [#allocation3], 0
    %8 = vsyncpa [#allocation6], 0
    %9 = vsyncpa [#allocation4], 0
    // Predicated region
    $region2: #{tpu_custom_call.1} parent=1 // pred_check
      _
    $region3: #{tpu_custom_call.1} parent=1 // pred_check_branch
      %11 = sbr.rel (0) target = $region5
    $region4: #{tpu_custom_call.1} parent=1 // pred_region
      %s13 = ssub.s32 2048, 2048
      %14 = vsyncadd [#allocation3], %s13
      %s15 = sshll.u32 [#allocation2], 4
      %s16 = int_to_ptr.vmem [resolvable:$true] %s15
      %21 = dma.hbm_to_vmem [thread:$0]  %s0, 2048, %s16, [#allocation3], 512, 512, 32
    $region5: #{tpu_custom_call.1} parent=1 // pred_fallthru
      _
    // Predicated region
    $region6: #{tpu_custom_call.1} parent=1 // pred_check
      _
    $region7: #{tpu_custom_call.1} parent=1 // pred_check_branch
      %23 = sbr.rel (0) target = $region9
    $region8: #{tpu_custom_call.1} parent=1 // pred_region
      %s25 = ssub.s32 1024, 1024
      %26 = vsyncadd [#allocation6], %s25
      %s27 = sshll.u32 [#allocation5], 4
      %s28 = int_to_ptr.vmem [resolvable:$true] %s27
      %33 = dma.hbm_to_vmem [thread:$0]  %s1, 1024, %s28, [#allocation6], 512, 512, 32
    $region9: #{tpu_custom_call.1} parent=1 // pred_fallthru
      _
    // Predicated region
    $region10: #{tpu_custom_call.1} parent=1 // pred_check
      _
    $region11: #{tpu_custom_call.1} parent=1 // pred_check_branch
      %35 = sbr.rel (0) target = $region13
    $region12: #{tpu_custom_call.1} parent=1 // pred_region
      %36 = dma.done [#allocation3], 2048
    $region13: #{tpu_custom_call.1} parent=1 // pred_fallthru
      _
    // Predicated region
    $region14: #{tpu_custom_call.1} parent=1 // pred_check
      _
    $region15: #{tpu_custom_call.1} parent=1 // pred_check_branch
      %38 = sbr.rel (0) target = $region17
    $region16: #{tpu_custom_call.1} parent=1 // pred_region
      %39 = dma.done [#allocation6], 1024
    $region17: #{tpu_custom_call.1} parent=1 // pred_fallthru
      _
    %v40 = vld [vmem:[#allocation2] sm:$0xff]
    %v41 = vld [vmem:[#allocation2 + $0x8] sm:$0xff]
    %v42 = vld [vmem:[#allocation2 + $0x10] sm:$0xff]
    %v43 = vld [vmem:[#allocation2 + $0x18] sm:$0xff]
    %v44 = vld [vmem:[#allocation2 + $0x20] sm:$0xff]
    %v45 = vld [vmem:[#allocation2 + $0x28] sm:$0xff]
    %v46 = vld [vmem:[#allocation2 + $0x30] sm:$0xff]
    %v47 = vld [vmem:[#allocation2 + $0x38] sm:$0xff]
    %v48 = vld [vmem:[#allocation2 + $0x40] sm:$0xff]
    %v49 = vld [vmem:[#allocation2 + $0x48] sm:$0xff]
    %v50 = vld [vmem:[#allocation2 + $0x50] sm:$0xff]
    %v51 = vld [vmem:[#allocation2 + $0x58] sm:$0xff]
    %v52 = vld [vmem:[#allocation2 + $0x60] sm:$0xff]
    %v53 = vld [vmem:[#allocation2 + $0x68] sm:$0xff]
    %v54 = vld [vmem:[#allocation2 + $0x70] sm:$0xff]
    %v55 = vld [vmem:[#allocation2 + $0x78] sm:$0xff]
    %v56 = vld [vmem:[#allocation5] sm:$0xff]
    %v57 = vld [vmem:[#allocation5 + $0x8] sm:$0xff]
    %v58 = vld [vmem:[#allocation5 + $0x10] sm:$0xff]
    %v59 = vld [vmem:[#allocation5 + $0x18] sm:$0xff]
    %v60 = vld [vmem:[#allocation5 + $0x20] sm:$0xff]
    %v61 = vld [vmem:[#allocation5 + $0x28] sm:$0xff]
    %v62 = vld [vmem:[#allocation5 + $0x30] sm:$0xff]
    %v63 = vld [vmem:[#allocation5 + $0x38] sm:$0xff]
    %v64 = vadd.f32 %v40, %v56
    %v65 = vadd.f32 %v41, %v57
    %v66 = vadd.f32 %v42, %v58
    %v67 = vadd.f32 %v43, %v59
    %v68 = vadd.f32 %v44, %v60
    %v69 = vadd.f32 %v45, %v61
    %v70 = vadd.f32 %v46, %v62
    %v71 = vadd.f32 %v47, %v63
    %v72 = vadd.f32 %v48, %v56
    %v73 = vadd.f32 %v49, %v57
    %v74 = vadd.f32 %v50, %v58
    %v75 = vadd.f32 %v51, %v59
    %v76 = vadd.f32 %v52, %v60
    %v77 = vadd.f32 %v53, %v61
    %v78 = vadd.f32 %v54, %v62
    %v79 = vadd.f32 %v55, %v63
    %80 = vst [vmem:[#allocation7] sm:$0xff] %v64
    %81 = vst [vmem:[#allocation7 + $0x8] sm:$0xff] %v65
    %82 = vst [vmem:[#allocation7 + $0x10] sm:$0xff] %v66
    %83 = vst [vmem:[#allocation7 + $0x18] sm:$0xff] %v67
    %84 = vst [vmem:[#allocation7 + $0x20] sm:$0xff] %v68
    %85 = vst [vmem:[#allocation7 + $0x28] sm:$0xff] %v69
    %86 = vst [vmem:[#allocation7 + $0x30] sm:$0xff] %v70
    %87 = vst [vmem:[#allocation7 + $0x38] sm:$0xff] %v71
    %88 = vst [vmem:[#allocation7 + $0x40] sm:$0xff] %v72
    %89 = vst [vmem:[#allocation7 + $0x48] sm:$0xff] %v73
    %90 = vst [vmem:[#allocation7 + $0x50] sm:$0xff] %v74
    %91 = vst [vmem:[#allocation7 + $0x58] sm:$0xff] %v75
    %92 = vst [vmem:[#allocation7 + $0x60] sm:$0xff] %v76
    %93 = vst [vmem:[#allocation7 + $0x68] sm:$0xff] %v77
    %94 = vst [vmem:[#allocation7 + $0x70] sm:$0xff] %v78
    %95 = vst [vmem:[#allocation7 + $0x78] sm:$0xff] %v79
    // Predicated region
    $region18: #{tpu_custom_call.1} parent=1 // pred_check
      _
    $region19: #{tpu_custom_call.1} parent=1 // pred_check_branch
      %97 = sbr.rel (0) target = $region21
    $region20: #{tpu_custom_call.1} parent=1 // pred_region
      %s99 = ssub.s32 2048, 2048
      %100 = vsyncadd [#allocation4], %s99
      %s101 = sshll.u32 [#allocation7], 4
      %s102 = int_to_ptr.vmem [resolvable:$true] %s101
      %107 = dma.vmem_to_hbm [thread:$0]  %s102, 2048, %s2, [#allocation4], 512, 512, 32
    $region21: #{tpu_custom_call.1} parent=1 // pred_fallthru
      _
    // Predicated region
    $region22: #{tpu_custom_call.1} parent=1 // pred_check
      _
    $region23: #{tpu_custom_call.1} parent=1 // pred_check_branch
      %109 = sbr.rel (0) target = $region25
    $region24: #{tpu_custom_call.1} parent=1 // pred_region
      %110 = dma.done [#allocation4], 2048
    $region25: #{tpu_custom_call.1} parent=1 // pred_fallthru
      _
    %111 = vsyncpa [#allocation3], 1
    %112 = vsyncpa [#allocation6], 1
    %113 = vsyncpa [#allocation4], 1

</llo_original>
